<compile_context>
chip_gen: v7x
topology: tpu7x:2x2x1
jax: 0.10.0
libtpu: 0.0.40
codegen_flags: <defaults>
</compile_context>

<pallas_src>
import functools

import jax
import jax.numpy as jnp
from jax.experimental import pallas as pl
from jax.experimental.pallas import tpu as pltpu


def _neuron_kernel(hx_ref, wcat_ref, wopad_ref, bias_ref, out_ref, *,
                   alpha, beta, hidden_size):
    """Fused forward step.

    hx_ref   : (B, H+I)      [hidden | x]
    wcat_ref : (H+I, H)      [W_recurrent.T ; W_input.T]
    wopad_ref: (H, P)        W_output.T zero-padded to P (=128) lanes
    bias_ref : (1, H+P)      [bias_hidden | bias_output (padded)]
    out_ref  : (B, H+P)      [new_hidden | prediction (padded)]
    """
    H = hidden_size
    hx = hx_ref[...]                       # (B, H+I)
    h = hx[:, :H]                          # (B, H) -- 128-lane-aligned slice

    # Fused input + recurrent contribution (single MXU op) + hidden bias.
    pre = jnp.dot(hx, wcat_ref[...], preferred_element_type=jnp.float32)
    pre = pre + bias_ref[:, :H]            # broadcast over batch

    # new_h = h + dt * (-h + tanh(pre)) / tau  ==  beta*h + alpha*tanh(pre)
    new_h = h * beta + jnp.tanh(pre) * alpha

    # prediction (lane-padded): new_h @ W_output.T_pad + bias_output_pad
    pred = jnp.dot(new_h, wopad_ref[...], preferred_element_type=jnp.float32)
    pred = pred + bias_ref[:, H:]

    # Single lane-dense output slab; both stores at 128-lane boundaries.
    out_ref[:, :H] = new_h
    out_ref[:, H:] = pred


def pack_params(w_input, w_recurrent, w_output, bias_hidden, bias_output,
                pred_pad=128):
    """One-time parameter packing (hoisted out of the per-step hot path)."""
    H, I = w_input.shape
    w_cat = jnp.concatenate(
        [jnp.asarray(w_recurrent, jnp.float32).T,        # rows 0..H-1
         jnp.asarray(w_input, jnp.float32).T],           # rows H..H+I-1
        axis=0)                                          # (H+I, H)
    wo_pad = jnp.zeros((H, pred_pad), jnp.float32)
    wo_pad = wo_pad.at[:, :I].set(jnp.asarray(w_output, jnp.float32).T)
    bias_cat = jnp.zeros((1, H + pred_pad), jnp.float32)
    bias_cat = bias_cat.at[0, :H].set(jnp.asarray(bias_hidden, jnp.float32))
    bias_cat = bias_cat.at[0, H:H + I].set(jnp.asarray(bias_output, jnp.float32))
    return w_cat, wo_pad, bias_cat


@functools.partial(jax.jit,
                   static_argnames=("input_size", "hidden_size", "tau", "dt"))
def continuous_time_neuron_step(x, hidden, w_cat, wo_pad, bias_cat, *,
                                input_size, hidden_size, tau=0.1, dt=0.01):
    """Single forward step. Returns (prediction (B,I), new_hidden (B,H))."""
    B = x.shape[0]
    H, I = hidden_size, input_size
    P = wo_pad.shape[1]                    # prediction lane padding (128)
    alpha = float(dt) / float(tau)
    beta = 1.0 - alpha

    # [hidden | x] so the in-kernel hidden slice sits on a 128-lane boundary.
    hx = jnp.concatenate(
        [hidden.astype(jnp.float32), x.astype(jnp.float32)], axis=1)  # (B, H+I)

    vmem = pl.BlockSpec(memory_space=pltpu.MemorySpace.VMEM)
    kernel = functools.partial(_neuron_kernel,
                               alpha=alpha, beta=beta, hidden_size=H)

    flops = 2 * B * ((H + I) * H + H * P)
    bytes_accessed = 4 * (hx.size + w_cat.size + wo_pad.size + bias_cat.size
                          + B * (H + P))

    out = pl.pallas_call(
        kernel,
        out_shape=jax.ShapeDtypeStruct((B, H + P), jnp.float32),
        in_specs=[vmem, vmem, vmem, vmem],
        out_specs=vmem,
        cost_estimate=pl.CostEstimate(flops=flops,
                                      transcendentals=B * H,
                                      bytes_accessed=bytes_accessed),
    )(hx, w_cat, wo_pad, bias_cat)

    new_h = out[:, :H]
    pred = out[:, H:H + I]
    return pred, new_h


def _xavier_uniform(key, shape):
    fan_out, fan_in = shape
    limit = jnp.sqrt(6.0 / (fan_in + fan_out))
    return jax.random.uniform(key, shape, jnp.float32, -limit, limit)


def _reference_step(x, hidden, W_input, W_recurrent, W_output,
                    bias_hidden, bias_output, tau, dt):
    ic = x @ W_input.T
    rc = hidden @ W_recurrent.T
    dh_dt = (-hidden + jnp.tanh(ic + rc + bias_hidden)) / tau
    new_h = hidden + dh_dt * dt
    pred = new_h @ W_output.T + bias_output
    return pred, new_h


if __name__ == "__main__":
    INPUT_SIZE = 64
    HIDDEN_SIZE = 128
    BATCH = 2
    TAU = 0.1
    DT = 0.01

    root = jax.random.PRNGKey(0)
    k_x1, k_x2, k_wi, k_wr, k_wo = jax.random.split(root, 5)

    x1 = jax.random.normal(k_x1, (BATCH, INPUT_SIZE), jnp.float32)
    x2 = jax.random.normal(k_x2, (BATCH, INPUT_SIZE), jnp.float32)
    hidden0 = jnp.zeros((BATCH, HIDDEN_SIZE), jnp.float32)  # default init state

    # deterministic parameter init (xavier_uniform, as in _initialize_weights)
    W_input = _xavier_uniform(k_wi, (HIDDEN_SIZE, INPUT_SIZE))
    W_recurrent = _xavier_uniform(k_wr, (HIDDEN_SIZE, HIDDEN_SIZE))
    W_output = _xavier_uniform(k_wo, (INPUT_SIZE, HIDDEN_SIZE))
    bias_hidden = jnp.zeros((HIDDEN_SIZE,), jnp.float32)
    bias_output = jnp.zeros((INPUT_SIZE,), jnp.float32)

    # One-time packing of parameters into kernel layout.
    w_cat, wo_pad, bias_cat = pack_params(
        W_input, W_recurrent, W_output, bias_hidden, bias_output)

    # Two chained steps (second step exercises the recurrent path).
    pred1, h1 = continuous_time_neuron_step(
        x1, hidden0, w_cat, wo_pad, bias_cat,
        input_size=INPUT_SIZE, hidden_size=HIDDEN_SIZE, tau=TAU, dt=DT)
    pred2, h2 = continuous_time_neuron_step(
        x2, h1, w_cat, wo_pad, bias_cat,
        input_size=INPUT_SIZE, hidden_size=HIDDEN_SIZE, tau=TAU, dt=DT)
    pred1, h1 = jax.block_until_ready(pred1), jax.block_until_ready(h1)
    pred2, h2 = jax.block_until_ready(pred2), jax.block_until_ready(h2)

    # Pure-JAX reference (mirrors the PyTorch forward exactly).
    ref_pred1, ref_h1 = _reference_step(x1, hidden0, W_input, W_recurrent,
                                        W_output, bias_hidden, bias_output,
                                        TAU, DT)
    ref_pred2, ref_h2 = _reference_step(x2, ref_h1, W_input, W_recurrent,
                                        W_output, bias_hidden, bias_output,
                                        TAU, DT)

    assert pred1.shape == (BATCH, INPUT_SIZE) and h1.shape == (BATCH, HIDDEN_SIZE)
    assert jnp.allclose(pred1, ref_pred1, atol=1e-5, rtol=1e-5)
    assert jnp.allclose(h1, ref_h1, atol=1e-5, rtol=1e-5)
    assert jnp.allclose(pred2, ref_pred2, atol=1e-5, rtol=1e-5)
    assert jnp.allclose(h2, ref_h2, atol=1e-5, rtol=1e-5)

    print("KERNEL_OK")
</pallas_src>

<mosaic_0001>
module attributes {stable_mosaic.version = 11 : i64} {
  func.func @_neuron_kernel(%arg0: memref<2x192xf32, #tpu.memory_space<vmem>>, %arg1: memref<192x128xf32, #tpu.memory_space<vmem>>, %arg2: memref<128x128xf32, #tpu.memory_space<vmem>>, %arg3: memref<1x256xf32, #tpu.memory_space<vmem>>, %arg4: memref<2x256xf32, #tpu.memory_space<vmem>>) attributes {dimension_semantics = [], scalar_prefetch = 0 : i64, scratch_operands = 0 : i64, tpu.core_type = #tpu.core_type<tc>} {
    %c0 = arith.constant 0 : index
    %c0_0 = arith.constant 0 : index
    %0 = vector.load %arg0[%c0, %c0_0] : memref<2x192xf32, #tpu.memory_space<vmem>>, vector<2x192xf32>
    %1 = vector.extract_strided_slice %0 {offsets = [0, 0], sizes = [2, 128], strides = [1, 1]} : vector<2x192xf32> to vector<2x128xf32>
    %c0_1 = arith.constant 0 : index
    %c0_2 = arith.constant 0 : index
    %2 = vector.load %arg1[%c0_1, %c0_2] : memref<192x128xf32, #tpu.memory_space<vmem>>, vector<192x128xf32>
    %cst = arith.constant dense<0.000000e+00> : vector<2x128xf32>
    %3 = tpu.matmul %0, %2, %cst {dimension_numbers = #tpu.dot_dimension_numbers<[1], [0], [0], [1], [0, 0, 1, 1], [], []>} : vector<2x192xf32>, vector<192x128xf32>, vector<2x128xf32> -> vector<2x128xf32>
    %c0_3 = arith.constant 0 : index
    %c0_4 = arith.constant 0 : index
    %4 = vector.load %arg3[%c0_3, %c0_4] : memref<1x256xf32, #tpu.memory_space<vmem>>, vector<1x128xf32>
    %5 = vector.broadcast %4 : vector<1x128xf32> to vector<2x128xf32>
    %6 = arith.addf %3, %5 : vector<2x128xf32>
    %cst_5 = arith.constant 0.899999976 : f32
    %7 = vector.broadcast %cst_5 : f32 to vector<2x128xf32>
    %8 = arith.mulf %1, %7 : vector<2x128xf32>
    %9 = math.tanh %6 : vector<2x128xf32>
    %cst_6 = arith.constant 1.000000e-01 : f32
    %10 = vector.broadcast %cst_6 : f32 to vector<2x128xf32>
    %11 = arith.mulf %9, %10 : vector<2x128xf32>
    %12 = arith.addf %8, %11 : vector<2x128xf32>
    %c0_7 = arith.constant 0 : index
    %c0_8 = arith.constant 0 : index
    %13 = vector.load %arg2[%c0_7, %c0_8] : memref<128x128xf32, #tpu.memory_space<vmem>>, vector<128x128xf32>
    %cst_9 = arith.constant dense<0.000000e+00> : vector<2x128xf32>
    %14 = tpu.matmul %12, %13, %cst_9 {dimension_numbers = #tpu.dot_dimension_numbers<[1], [0], [0], [1], [0, 0, 1, 1], [], []>} : vector<2x128xf32>, vector<128x128xf32>, vector<2x128xf32> -> vector<2x128xf32>
    %c0_10 = arith.constant 0 : index
    %c128 = arith.constant 128 : index
    %15 = vector.load %arg3[%c0_10, %c128] : memref<1x256xf32, #tpu.memory_space<vmem>>, vector<1x128xf32>
    %16 = vector.broadcast %15 : vector<1x128xf32> to vector<2x128xf32>
    %17 = arith.addf %14, %16 : vector<2x128xf32>
    %c0_11 = arith.constant 0 : index
    %c0_12 = arith.constant 0 : index
    %18 = vector.load %arg4[%c0_11, %c0_12] : memref<2x256xf32, #tpu.memory_space<vmem>>, vector<2x128xf32>
    tpu.vector_store %arg4[%c0_11, %c0_12], %12 {strides = array<i32>} : memref<2x256xf32, #tpu.memory_space<vmem>>, vector<2x128xf32>,
    %c0_13 = arith.constant 0 : index
    %c128_14 = arith.constant 128 : index
    %19 = vector.load %arg4[%c0_13, %c128_14] : memref<2x256xf32, #tpu.memory_space<vmem>>, vector<2x128xf32>
    tpu.vector_store %arg4[%c0_13, %c128_14], %17 {strides = array<i32>} : memref<2x256xf32, #tpu.memory_space<vmem>>, vector<2x128xf32>,
    return
  }
}

</mosaic_0001>

<llo_original>
// kernel: continuous_time_neuron_step.1
$region0: #{continuous_time_neuron_step.1}
  #allocation0 [shape = 'u32[]', space=smem, size = 0x4, offset = 0x4, fixed_abs, tag = 'smem constant byte address 0x4 - core index']
  #allocation1 [shape = 'u32[144,128]{1,0:T(1,128)}', space=vmem, size = 0x12000, scoped, tag = 'internal scratch']
  %s0 = inlined_call_operand.vmem [shape: f32[2,192], index: 0, kind: input, shape index: {}]
  %s1 = inlined_call_operand.hbm [shape: f32[192,128], index: 1, kind: input, shape index: {}]
  %s2 = inlined_call_operand.hbm [shape: f32[128,128], index: 2, kind: input, shape index: {}]
  %s3 = inlined_call_operand.vmem [shape: f32[1,256], index: 3, kind: input, shape index: {}]
  %s4 = inlined_call_operand.vmem [shape: f32[2,256], index: 4, kind: output, shape index: {}]
  %s5 = sld [smem:[#allocation0]]
  $region34: #{continuous_time_neuron_step.1} parent=0
    _
  %s7 = ssub.s32 1, %s5
  %s8 = scalar_select 0, %s7, %s5
  $region1: #{continuous_time_neuron_step.1} parent=0
    #allocation2 [shape = 'u8[98304]{0}', space=vmem, size = 0x18000, scoped, tag = 'input window, operand 1, single buffered']
    #allocation3 [shape = 's32[1]{0}', space=sflag, size = 0x4, scoped, tag = 'scoped memory for continuous_time_neuron_step.1']
    #allocation4 [shape = 'u8[65536]{0}', space=vmem, size = 0x10000, scoped, tag = 'input window, operand 2, single buffered']
    #allocation5 [shape = 's32[1]{0}', space=sflag, size = 0x4, scoped, tag = 'scoped memory for continuous_time_neuron_step.1']
    %9 = vsyncpa [#allocation3], 0
    %10 = vsyncpa [#allocation5], 0
    // Predicated region
    $region2: #{continuous_time_neuron_step.1} parent=1 // pred_check
      _
    $region3: #{continuous_time_neuron_step.1} parent=1 // pred_check_branch
      %12 = sbr.rel (0) target = $region5
    $region4: #{continuous_time_neuron_step.1} parent=1 // pred_region
      _
    $region5: #{continuous_time_neuron_step.1} parent=1 // pred_fallthru
      _
    // Predicated region
    $region6: #{continuous_time_neuron_step.1} parent=1 // pred_check
      _
    $region7: #{continuous_time_neuron_step.1} parent=1 // pred_check_branch
      %14 = sbr.rel (0) target = $region9
    $region8: #{continuous_time_neuron_step.1} parent=1 // pred_region
      %s16 = ssub.s32 3072, 3072
      %17 = vsyncadd [#allocation3], %s16
      %s18 = sshll.u32 [#allocation2], 4
      %s19 = int_to_ptr.vmem [resolvable:$true] %s18
      %24 = dma.hbm_to_vmem [thread:$0]  %s1, 3072, %s19, [#allocation3], 128, 128, 8
    $region9: #{continuous_time_neuron_step.1} parent=1 // pred_fallthru
      _
    // Predicated region
    $region10: #{continuous_time_neuron_step.1} parent=1 // pred_check
      _
    $region11: #{continuous_time_neuron_step.1} parent=1 // pred_check_branch
      %26 = sbr.rel (0) target = $region13
    $region12: #{continuous_time_neuron_step.1} parent=1 // pred_region
      %s28 = ssub.s32 2048, 2048
      %29 = vsyncadd [#allocation5], %s28
      %s30 = sshll.u32 [#allocation4], 4
      %s31 = int_to_ptr.vmem [resolvable:$true] %s30
      %36 = dma.hbm_to_vmem [thread:$0]  %s2, 2048, %s31, [#allocation5], 128, 128, 8
    $region13: #{continuous_time_neuron_step.1} parent=1 // pred_fallthru
      _
    // Predicated region
    $region14: #{continuous_time_neuron_step.1} parent=1 // pred_check
      _
    $region15: #{continuous_time_neuron_step.1} parent=1 // pred_check_branch
      %38 = sbr.rel (0) target = $region17
    $region16: #{continuous_time_neuron_step.1} parent=1 // pred_region
      _
    $region17: #{continuous_time_neuron_step.1} parent=1 // pred_fallthru
      _
    // Predicated region
    $region18: #{continuous_time_neuron_step.1} parent=1 // pred_check
      _
    $region19: #{continuous_time_neuron_step.1} parent=1 // pred_check_branch
      %40 = sbr.rel (0) target = $region21
    $region20: #{continuous_time_neuron_step.1} parent=1 // pred_region
      %41 = dma.done [#allocation3], 3072
    $region21: #{continuous_time_neuron_step.1} parent=1 // pred_fallthru
      _
    // Predicated region
    $region22: #{continuous_time_neuron_step.1} parent=1 // pred_check
      _
    $region23: #{continuous_time_neuron_step.1} parent=1 // pred_check_branch
      %43 = sbr.rel (0) target = $region25
    $region24: #{continuous_time_neuron_step.1} parent=1 // pred_region
      %44 = dma.done [#allocation5], 2048
    $region25: #{continuous_time_neuron_step.1} parent=1 // pred_fallthru
      _
    %v45 = vld [vmem:[%s0] sm:$0xf]
    %v46 = vld [vmem:[#allocation2] sm:$0xff]
    %v47 = vld [vmem:[#allocation2 + $0x8] sm:$0xff]
    %v48 = vld [vmem:[#allocation2 + $0x10] sm:$0xff]
    %v49 = vld [vmem:[#allocation2 + $0x18] sm:$0xff]
    %v50 = vld [vmem:[#allocation2 + $0x20] sm:$0xff]
    %v51 = vld [vmem:[#allocation2 + $0x28] sm:$0xff]
    %v52 = vld [vmem:[#allocation2 + $0x30] sm:$0xff]
    %v53 = vld [vmem:[#allocation2 + $0x38] sm:$0xff]
    %v54 = vld [vmem:[#allocation2 + $0x40] sm:$0xff]
    %v55 = vld [vmem:[#allocation2 + $0x48] sm:$0xff]
    %v56 = vld [vmem:[#allocation2 + $0x50] sm:$0xff]
    %v57 = vld [vmem:[#allocation2 + $0x58] sm:$0xff]
    %v58 = vld [vmem:[#allocation2 + $0x60] sm:$0xff]
    %v59 = vld [vmem:[#allocation2 + $0x68] sm:$0xff]
    %v60 = vld [vmem:[#allocation2 + $0x70] sm:$0xff]
    %v61 = vld [vmem:[#allocation2 + $0x78] sm:$0xff]
    %v62 = vld [vmem:[#allocation2 + $0x80] sm:$0xff]
    %v63 = vld [vmem:[#allocation2 + $0x88] sm:$0xff]
    %v64 = vld [vmem:[#allocation2 + $0x90] sm:$0xff]
    %v65 = vld [vmem:[#allocation2 + $0x98] sm:$0xff]
    %v66 = vld [vmem:[#allocation2 + $0xa0] sm:$0xff]
    %v67 = vld [vmem:[#allocation2 + $0xa8] sm:$0xff]
    %v68 = vld [vmem:[#allocation2 + $0xb0] sm:$0xff]
    %v69 = vld [vmem:[#allocation2 + $0xb8] sm:$0xff]
    %v70 = vld [vmem:[%s3] sm:$0x1]
    %v72 = vlaneseq
    %v73 = vshrl.u32 %v72, 7
    %v74 = vsub.s32 0, %v73
    %v75 = vrot.slane %v70, %v74
    %v79 = vunpack.c.l.s4 1983009808
    %v80 = vunpack.c.0.s8 %v79
    %v81 = vlaneseq
    %v82 = vshrl.u32 %v81, 7
    %v83 = vsub.s32 %v80, %v82
    %v84 = vrot.slane %v45, %v83
    %v85 = vcombine.high %v84, %v84
    %vm87 = vcmask 523264
    %v88 = vsel %vm87, %v85, 0
    %90 = vmatprep.subr.mxu0 0.0
    %91 = vmatpush1.msra.mxu0 %v46
    %92 = vmatprep.subr.mxu0 0.0
    %93 = vmatpush1.msra.mxu0 %v47
    %94 = vmatprep.subr.mxu0 0.0
    %95 = vmatpush1.msra.mxu0 %v48
    %96 = vmatprep.subr.mxu0 0.0
    %97 = vmatpush1.msra.mxu0 %v49
    %98 = vmatprep.subr.mxu0 0.0
    %99 = vmatpush1.msra.mxu0 %v50
    %100 = vmatprep.subr.mxu0 0.0
    %101 = vmatpush1.msra.mxu0 %v51
    %102 = vmatprep.subr.mxu0 0.0
    %103 = vmatpush1.msra.mxu0 %v52
    %104 = vmatprep.subr.mxu0 0.0
    %105 = vmatpush1.msra.mxu0 %v53
    %106 = vmatprep.subr.mxu0 0.0
    %107 = vmatpush1.msra.mxu0 %v54
    %108 = vmatprep.subr.mxu0 0.0
    %109 = vmatpush1.msra.mxu0 %v55
    %110 = vmatprep.subr.mxu0 0.0
    %111 = vmatpush1.msra.mxu0 %v56
    %112 = vmatprep.subr.mxu0 0.0
    %113 = vmatpush1.msra.mxu0 %v57
    %114 = vmatprep.subr.mxu0 0.0
    %115 = vmatpush1.msra.mxu0 %v58
    %116 = vmatprep.subr.mxu0 0.0
    %117 = vmatpush1.msra.mxu0 %v59
    %118 = vmatprep.subr.mxu0 0.0
    %119 = vmatpush1.msra.mxu0 %v60
    %120 = vmatprep.subr.mxu0 0.0
    %121 = vmatpush1.msra.mxu0 %v61
    %122 = vmatprep.subr.mxu0 0.0
    %123 = vmatpush1.msra.mxu0 %v62
    %124 = vmatprep.subr.mxu0 0.0
    %125 = vmatpush1.msra.mxu0 %v63
    %126 = vmatprep.subr.mxu0 0.0
    %127 = vmatpush1.msra.mxu0 %v64
    %128 = vmatprep.subr.mxu0 0.0
    %129 = vmatpush1.msra.mxu0 %v65
    %130 = vmatprep.subr.mxu0 0.0
    %131 = vmatpush1.msra.mxu0 %v66
    %132 = vmatprep.subr.mxu0 0.0
    %133 = vmatpush1.msra.mxu0 %v67
    %134 = vmatprep.subr.mxu0 0.0
    %135 = vmatpush1.msra.mxu0 %v68
    %136 = vmatprep.subr.mxu0 0.0
    %137 = vmatpush1.msra.mxu0 %v69
    %138 = vmatprep.subr.mxu0 0.0
    %139 = vmatpush1.msra.mxu0 0.0
    %140 = vmatprep.subr.mxu0 0.0
    %141 = vmatpush1.msra.mxu0 0.0
    %142 = vmatprep.subr.mxu0 0.0
    %143 = vmatpush1.msra.mxu0 0.0
    %144 = vmatprep.subr.mxu0 0.0
    %145 = vmatpush1.msra.mxu0 0.0
    %146 = vmatprep.subr.mxu0 0.0
    %147 = vmatpush1.msra.mxu0 0.0
    %148 = vmatprep.subr.mxu0 0.0
    %149 = vmatpush1.msra.mxu0 0.0
    %150 = vmatprep.subr.mxu0 0.0
    %151 = vmatpush1.msra.mxu0 0.0
    %152 = vmatprep.subr.mxu0 0.0
    %153 = vmatpush1.msra.mxu0 0.0
    %154 = vmatprep.mubr.f32.mxu0 %v88
    %155 = vmatmul.mubr.f32.gmra.mrb[0].mxu0 %v84
    %v156 = vpop.f32.mrb[0].mxu0
    %v157 = vadd.f32 %v75, %v156
    %v158 = vpop.f32.mrb[0].mxu0
    %159 = vdwg.mxu0
    %v160 = vmul.f32 %v45, 0.9
    %v161 = vtanh.pop %v157
    %v162 = vmul.f32 %v161, 0.1
    %v163 = vadd.f32 %v160, %v162
    %v164 = vld [vmem:[#allocation4] sm:$0xff]
    %v165 = vld [vmem:[#allocation4 + $0x8] sm:$0xff]
    %v166 = vld [vmem:[#allocation4 + $0x10] sm:$0xff]
    %v167 = vld [vmem:[#allocation4 + $0x18] sm:$0xff]
    %v168 = vld [vmem:[#allocation4 + $0x20] sm:$0xff]
    %v169 = vld [vmem:[#allocation4 + $0x28] sm:$0xff]
    %v170 = vld [vmem:[#allocation4 + $0x30] sm:$0xff]
    %v171 = vld [vmem:[#allocation4 + $0x38] sm:$0xff]
    %v172 = vld [vmem:[#allocation4 + $0x40] sm:$0xff]
    %v173 = vld [vmem:[#allocation4 + $0x48] sm:$0xff]
    %v174 = vld [vmem:[#allocation4 + $0x50] sm:$0xff]
    %v175 = vld [vmem:[#allocation4 + $0x58] sm:$0xff]
    %v176 = vld [vmem:[#allocation4 + $0x60] sm:$0xff]
    %v177 = vld [vmem:[#allocation4 + $0x68] sm:$0xff]
    %v178 = vld [vmem:[#allocation4 + $0x70] sm:$0xff]
    %v179 = vld [vmem:[#allocation4 + $0x78] sm:$0xff]
    %v180 = vld [vmem:[%s3 + $0x1] sm:$0x1]
    %v182 = vlaneseq
    %v183 = vshrl.u32 %v182, 7
    %v184 = vsub.s32 0, %v183
    %v185 = vrot.slane %v180, %v184
    %187 = vmatprep.subr.mxu0 0.0
    %188 = vmatpush1.msra.mxu0 %v164
    %189 = vmatprep.subr.mxu0 0.0
    %190 = vmatpush1.msra.mxu0 %v165
    %191 = vmatprep.subr.mxu0 0.0
    %192 = vmatpush1.msra.mxu0 %v166
    %193 = vmatprep.subr.mxu0 0.0
    %194 = vmatpush1.msra.mxu0 %v167
    %195 = vmatprep.subr.mxu0 0.0
    %196 = vmatpush1.msra.mxu0 %v168
    %197 = vmatprep.subr.mxu0 0.0
    %198 = vmatpush1.msra.mxu0 %v169
    %199 = vmatprep.subr.mxu0 0.0
    %200 = vmatpush1.msra.mxu0 %v170
    %201 = vmatprep.subr.mxu0 0.0
    %202 = vmatpush1.msra.mxu0 %v171
    %203 = vmatprep.subr.mxu0 0.0
    %204 = vmatpush1.msra.mxu0 %v172
    %205 = vmatprep.subr.mxu0 0.0
    %206 = vmatpush1.msra.mxu0 %v173
    %207 = vmatprep.subr.mxu0 0.0
    %208 = vmatpush1.msra.mxu0 %v174
    %209 = vmatprep.subr.mxu0 0.0
    %210 = vmatpush1.msra.mxu0 %v175
    %211 = vmatprep.subr.mxu0 0.0
    %212 = vmatpush1.msra.mxu0 %v176
    %213 = vmatprep.subr.mxu0 0.0
    %214 = vmatpush1.msra.mxu0 %v177
    %215 = vmatprep.subr.mxu0 0.0
    %216 = vmatpush1.msra.mxu0 %v178
    %217 = vmatprep.subr.mxu0 0.0
    %218 = vmatpush1.msra.mxu0 %v179
    %219 = vmatprep.subr.mxu0 0.0
    %220 = vmatpush1.msra.mxu0 0.0
    %221 = vmatprep.subr.mxu0 0.0
    %222 = vmatpush1.msra.mxu0 0.0
    %223 = vmatprep.subr.mxu0 0.0
    %224 = vmatpush1.msra.mxu0 0.0
    %225 = vmatprep.subr.mxu0 0.0
    %226 = vmatpush1.msra.mxu0 0.0
    %227 = vmatprep.subr.mxu0 0.0
    %228 = vmatpush1.msra.mxu0 0.0
    %229 = vmatprep.subr.mxu0 0.0
    %230 = vmatpush1.msra.mxu0 0.0
    %231 = vmatprep.subr.mxu0 0.0
    %232 = vmatpush1.msra.mxu0 0.0
    %233 = vmatprep.subr.mxu0 0.0
    %234 = vmatpush1.msra.mxu0 0.0
    %235 = vmatprep.subr.mxu0 0.0
    %236 = vmatpush1.msra.mxu0 0.0
    %237 = vmatprep.subr.mxu0 0.0
    %238 = vmatpush1.msra.mxu0 0.0
    %239 = vmatprep.subr.mxu0 0.0
    %240 = vmatpush1.msra.mxu0 0.0
    %241 = vmatprep.subr.mxu0 0.0
    %242 = vmatpush1.msra.mxu0 0.0
    %243 = vmatprep.subr.mxu0 0.0
    %244 = vmatpush1.msra.mxu0 0.0
    %245 = vmatprep.subr.mxu0 0.0
    %246 = vmatpush1.msra.mxu0 0.0
    %247 = vmatprep.subr.mxu0 0.0
    %248 = vmatpush1.msra.mxu0 0.0
    %249 = vmatprep.subr.mxu0 0.0
    %250 = vmatpush1.msra.mxu0 0.0
    %251 = vmatprep.mubr.f32.mxu0 0.0
    %252 = vmatmul.mubr.f32.gmra.mrb[0].mxu0 %v163
    %v253 = vpop.f32.mrb[0].mxu0
    %v254 = vadd.f32 %v185, %v253
    %v255 = vpop.f32.mrb[0].mxu0
    %256 = vdwg.mxu0
    %257 = vst [vmem:[%s4] sm:$0x3] %v163
    %258 = vst [vmem:[%s4 + $0x2] sm:$0x3] %v254
    // Predicated region
    $region26: #{continuous_time_neuron_step.1} parent=1 // pred_check
      _
    $region27: #{continuous_time_neuron_step.1} parent=1 // pred_check_branch
      %260 = sbr.rel (0) target = $region29
    $region28: #{continuous_time_neuron_step.1} parent=1 // pred_region
      _
    $region29: #{continuous_time_neuron_step.1} parent=1 // pred_fallthru
      _
    // Predicated region
    $region30: #{continuous_time_neuron_step.1} parent=1 // pred_check
      _
    $region31: #{continuous_time_neuron_step.1} parent=1 // pred_check_branch
      %262 = sbr.rel (0) target = $region33
    $region32: #{continuous_time_neuron_step.1} parent=1 // pred_region
      _
    $region33: #{continuous_time_neuron_step.1} parent=1 // pred_fallthru
      _
    %263 = vsyncpa [#allocation3], 1
    %264 = vsyncpa [#allocation5], 1

</llo_original>
